<compile_context>
chip_gen: v5e
topology: v5e:2x2
jax: 0.10.0
libtpu: 0.0.40
codegen_flags: <defaults>
</compile_context>

<pallas_src>
import functools

import jax
import jax.numpy as jnp
from jax.experimental import pallas as pl
from jax.experimental.pallas import tpu as pltpu

F = 20          # feature dim of the module input [N, 20]
EXPAND = 50     # trailing expand size of the final output
G = 128         # original rows packed per group row in the lane-dense path
GF = G * F      # 2560 lanes, a multiple of 128

_VMEM_LIMIT = 40 * 1024 * 1024     # well under v7x's 64 MiB physical VMEM
_BUF_BUDGET = 10 * 1024 * 1024     # per double-buffered input buffer


def _round_up(a: int, b: int) -> int:
    return -(-a // b) * b


def _choose_tile(n_rows, row_bytes, *, granule, buf_budget, target_tiles,
                 min_tile_bytes):
    """Rows per grid tile: `granule`-aligned, fits the VMEM buffer budget, and
    splits into ~target_tiles tiles (megacore on v7x) only while each tile's
    DMA stays above min_tile_bytes (so per-step overhead doesn't dominate)."""
    cap = max(granule, (buf_budget // row_bytes) // granule * granule)
    floor = max(granule, _round_up(-(-min_tile_bytes // row_bytes), granule))
    t = min(cap, max(floor, _round_up(pl.cdiv(n_rows, target_tiles), granule)))
    if t >= n_rows:
        return n_rows          # single block == full extent (alignment-exempt)
    return t


def _get_index_dense_kernel(x_ref, sel_ref, o_ref):
    # x_ref  : (tg, GF) tile -- G=128 original rows packed per row, lane-dense.
    # sel_ref: (GF, G) constant block-diagonal 0/1 selector (bf16), resident.
    # o_ref  : (tg, G) int32 (count - 1), lane-dense unmasked stores.
    ones = jnp.where(x_ref[...] > 0, jnp.bfloat16(1.0), jnp.bfloat16(0.0))
    cnt = jnp.dot(ones, sel_ref[...], preferred_element_type=jnp.float32)
    o_ref[...] = cnt.astype(jnp.int32) - 1


def _get_index_narrow_kernel(x_ref, o_ref):
    # Fallback for N not a multiple of 128.
    # x_ref: (tn, F) tile of input rows (native dtype).
    # o_ref: (1, tn) int32 (count - 1), lane-dense row vector.
    gt = (x_ref[...] > 0).astype(jnp.float32)
    cnt = jnp.sum(gt, axis=1) - 1.0                 # counts <= 20, exact in f32
    o_ref[...] = cnt[None, :].astype(jnp.int32)


def get_index(x, *, target_tiles: int = 8, min_tile_bytes: int = 1 << 20,
              buf_budget: int = _BUF_BUDGET):
    """x: [N, F] float (any float dtype) -> [N, 1, EXPAND] int32."""
    n, f = x.shape
    assert f == F, f"expected feature dim {F}, got {f}"
    itemsize = jnp.dtype(x.dtype).itemsize
    cparams = pltpu.CompilerParams(dimension_semantics=("parallel",),
                                   vmem_limit_bytes=_VMEM_LIMIT)

    if n >= G and n % G == 0:
        # ---- Lane-dense MXU path ------------------------------------------
        n_groups = n // G
        x2 = x.reshape(n_groups, GF)        # free metadata reshape (row-major)
        # Block-diagonal selector: sel[g*F + j, g] = 1  (values 0/1, exact bf16)
        lane_group = jnp.arange(GF, dtype=jnp.int32) // F
        sel = (lane_group[:, None] == jnp.arange(G, dtype=jnp.int32)[None, :]
               ).astype(jnp.bfloat16)
        tg = _choose_tile(n_groups, GF * itemsize, granule=8,
                          buf_budget=buf_budget, target_tiles=target_tiles,
                          min_tile_bytes=min_tile_bytes)
        counts = pl.pallas_call(
            _get_index_dense_kernel,
            out_shape=jax.ShapeDtypeStruct((n_groups, G), jnp.int32),
            grid=(pl.cdiv(n_groups, tg),),
            in_specs=[pl.BlockSpec((tg, GF), lambda i: (i, 0)),
                      pl.BlockSpec((GF, G), lambda i: (0, 0))],  # constant block
            out_specs=pl.BlockSpec((tg, G), lambda i: (i, 0)),
            compiler_params=cparams,
        )(x2, sel)
        flat = counts.reshape(n)
    else:
        # ---- Fallback path (arbitrary N) ----------------------------------
        # (tn, 20) blocks; padded VMEM footprint is 128 lanes per row.
        tn = _choose_tile(n, 128 * itemsize, granule=128,
                          buf_budget=buf_budget, target_tiles=target_tiles,
                          min_tile_bytes=min_tile_bytes)
        counts = pl.pallas_call(
            _get_index_narrow_kernel,
            out_shape=jax.ShapeDtypeStruct((1, n), jnp.int32),
            grid=(pl.cdiv(n, tn),),
            in_specs=[pl.BlockSpec((tn, F), lambda i: (i, 0))],
            out_specs=pl.BlockSpec((1, tn), lambda i: (0, i)),
            compiler_params=cparams,
        )(x)
        flat = counts[0]

    # unsqueeze + expand(-1, -1, 50): pure broadcast, fused into any consumer.
    # TODO(synk): consumers should take the (N,) counts directly if they would
    # otherwise materialize this [N,1,50] slab (it is 2.5x the input bytes).
    return jnp.broadcast_to(flat.reshape(n, 1, 1), (n, 1, EXPAND))


def _reference(x):
    cnt = jnp.sum(x > 0, axis=1, keepdims=True).astype(jnp.int32) - 1
    return jnp.broadcast_to(cnt[:, :, None], (x.shape[0], 1, EXPAND))


if __name__ == "__main__":
    key = jax.random.PRNGKey(0)
    k1, k2, k3, k4 = jax.random.split(key, 4)

    # 1) tiny N (fallback path, single full block; N not a multiple of 8).
    x1 = jax.random.normal(k1, (10, F), dtype=jnp.float32)
    o1 = jax.block_until_ready(get_index(x1))
    assert o1.shape == (10, 1, EXPAND) and o1.dtype == jnp.int32
    assert bool(jnp.all(o1 == _reference(x1))), "case 1 mismatch"

    # 2) fallback path, multi-tile with a partial last block, bf16 input.
    f_small_tiles = jax.jit(functools.partial(get_index, target_tiles=3,
                                              min_tile_bytes=1))
    x2 = jax.random.normal(k2, (300, F), dtype=jnp.bfloat16)
    o2 = jax.block_until_ready(f_small_tiles(x2))
    assert o2.shape == (300, 1, EXPAND)
    assert bool(jnp.all(o2 == _reference(x2))), "case 2 mismatch"

    # 3) lane-dense MXU path, multi-tile with a partial last group block.
    x3 = jax.random.normal(k3, (2560, F), dtype=jnp.float32)
    o3 = jax.block_until_ready(f_small_tiles(x3))
    assert o3.shape == (2560, 1, EXPAND)
    assert bool(jnp.all(o3 == _reference(x3))), "case 3 mismatch"

    # 4) lane-dense MXU path, single full block, bf16 input.
    x4 = jax.random.normal(k4, (384, F), dtype=jnp.bfloat16)
    o4 = jax.block_until_ready(jax.jit(get_index)(x4))
    assert o4.shape == (384, 1, EXPAND)
    assert bool(jnp.all(o4 == _reference(x4))), "case 4 mismatch"

    print("KERNEL_OK")
</pallas_src>

<mosaic_0001>
module attributes {stable_mosaic.version = 11 : i64} {
  func.func @_get_index_narrow_kernel(%arg0: i32, %arg1: memref<10x20xf32, #tpu.memory_space<vmem>>, %arg2: memref<1x10xi32, #tpu.memory_space<vmem>>) attributes {dimension_semantics = [#tpu.dimension_semantics<parallel>], iteration_bounds = array<i64: 1>, scalar_prefetch = 0 : i64, scratch_operands = 0 : i64, tpu.core_type = #tpu.core_type<tc>, window_params = [{transform_indices = @transform_0, window_bounds = array<i64: 10, 20>}, {transform_indices = @transform_1, window_bounds = array<i64: 1, 10>}]} {
    %c0 = arith.constant 0 : index
    %c0_0 = arith.constant 0 : index
    %0 = vector.load %arg1[%c0, %c0_0] : memref<10x20xf32, #tpu.memory_space<vmem>>, vector<10x20xf32>
    %cst = arith.constant 0.000000e+00 : f32
    %1 = vector.broadcast %cst : f32 to vector<10x20xf32>
    %2 = arith.cmpf ogt, %0, %1 : vector<10x20xf32>
    %3 = arith.extui %2 : vector<10x20xi1> to vector<10x20xi32>
    %4 = arith.sitofp %3 : vector<10x20xi32> to vector<10x20xf32>
    %cst_1 = arith.constant dense<0.000000e+00> : vector<10xf32>
    %5 = vector.multi_reduction <add>, %4, %cst_1 [1] : vector<10x20xf32> to vector<10xf32>
    %cst_2 = arith.constant 1.000000e+00 : f32
    %6 = vector.broadcast %cst_2 : f32 to vector<10xf32>
    %7 = arith.subf %5, %6 : vector<10xf32>
    %8 = vector.shape_cast %7 : vector<10xf32> to vector<1x10xf32>
    %9 = arith.fptosi %8 : vector<1x10xf32> to vector<1x10xi32>
    %c0_3 = arith.constant 0 : index
    %c0_4 = arith.constant 0 : index
    %10 = vector.load %arg2[%c0_3, %c0_4] : memref<1x10xi32, #tpu.memory_space<vmem>>, vector<1x10xi32>
    tpu.vector_store %arg2[%c0_3, %c0_4], %9 {strides = array<i32>} : memref<1x10xi32, #tpu.memory_space<vmem>>, vector<1x10xi32>,
    return
  }
  func.func @transform_0(%arg0: i32) -> (i32, i32) {
    %c0_i32 = arith.constant 0 : i32
    %c0_i32_0 = arith.constant 0 : i32
    return %arg0, %c0_i32 : i32, i32
  }
  func.func @transform_1(%arg0: i32) -> (i32, i32) {
    %c0_i32 = arith.constant 0 : i32
    %c0_i32_0 = arith.constant 0 : i32
    return %c0_i32, %arg0 : i32, i32
  }
}

</mosaic_0001>

<llo_original>
// kernel: tpu_custom_call.1
$region0: #{tpu_custom_call.1}
  #allocation0 [shape = 'u32[]', space=smem, size = 0x4, offset = 0x4, fixed_abs, tag = 'smem constant byte address 0x4 - core index']
  #allocation1 [shape = 'u32[72,128]{1,0:T(1,128)}', space=vmem, size = 0x9000, scoped, tag = 'internal scratch']
  %s0 = inlined_call_operand.hbm [shape: f32[10,20], index: 0, kind: input, shape index: {}]
  %s1 = inlined_call_operand.hbm [shape: s32[1,10], index: 1, kind: output, shape index: {}]
  %s2 = sld [smem:[#allocation0]]
  $region18: #{tpu_custom_call.1} parent=0
    _
  %s4 = ssub.s32 1, %s2
  %s5 = scalar_select 0, %s4, %s2
  $region1: #{tpu_custom_call.1} parent=0
    #allocation2 [shape = 'u8[8192]{0}', space=vmem, size = 0x2000, scoped, tag = 'input window, operand 0, single buffered']
    #allocation3 [shape = 's32[1]{0}', space=sflag, size = 0x4, scoped, tag = 'scoped memory for tpu_custom_call.1']
    #allocation4 [shape = 's32[1]{0}', space=sflag, size = 0x4, scoped, tag = 'scoped memory for tpu_custom_call.1']
    #allocation5 [shape = 'u8[512]{0}', space=vmem, size = 0x400, scoped, tag = 'output window, operand 0, single buffered']
    %6 = vsyncpa [#allocation3], 0
    %7 = vsyncpa [#allocation4], 0
    // Predicated region
    $region2: #{tpu_custom_call.1} parent=1 // pred_check
      _
    $region3: #{tpu_custom_call.1} parent=1 // pred_check_branch
      %9 = sbr.rel (0) target = $region5
    $region4: #{tpu_custom_call.1} parent=1 // pred_region
      %11 = vsyncadd [#allocation3], 0
      %s12 = sshll.u32 %s0, 4
      %s13 = int_to_ptr.hbm [resolvable:$true] %s12
      %s14 = sshll.u32 [#allocation2], 4
      %s15 = int_to_ptr.vmem [resolvable:$true] %s14
      %20 = dma.hbm_to_vmem [thread:$0]  %s13, 256, %s15, [#allocation3], 128, 128, 8
    $region5: #{tpu_custom_call.1} parent=1 // pred_fallthru
      _
    // Predicated region
    $region6: #{tpu_custom_call.1} parent=1 // pred_check
      _
    $region7: #{tpu_custom_call.1} parent=1 // pred_check_branch
      %22 = sbr.rel (0) target = $region9
    $region8: #{tpu_custom_call.1} parent=1 // pred_region
      %24 = dma.done [#allocation3], 256
    $region9: #{tpu_custom_call.1} parent=1 // pred_fallthru
      _
    %v25 = vld [vmem:[#allocation2] sm:$0xff]
    %v26 = vld [vmem:[#allocation2 + $0x8] sm:$0x3]
    %vm27 = vcmp.gt.f32.partialorder %v25, 0.0
    %vm28 = vcmp.gt.f32.partialorder %v26, 0.0
    %v29 = vsel %vm27, 1, 0
    %v30 = vsel %vm28, 1, 0
    %v31 = vcvt.s32.f32 %v29
    %v32 = vcvt.s32.f32 %v30
    %vm33 = vcmask 162816
    %v34 = vsel %vm33, %v31, 0.0
    %35 = vadd.xlane.f32.xlu0 %v34
    %v36 = vpop.xlane.xlu0 %35
    %vm37 = vcmask 156672
    %v38 = vsel %vm37, %v32, 0.0
    %39 = vadd.xlane.f32.xlu0 %v38
    %v40 = vpop.xlane.xlu0 %39
    %v41 = vsub.f32 %v36, 1.0
    %v42 = vsub.f32 %v40, 1.0
    %v43 = vcvt.f32.s32.to.zero.pseudo %v41
    %v44 = vcvt.f32.s32.to.zero.pseudo %v42
    %v45 = vlaneseq
    %v46 = vand.u32 %v45, 127
    %v47 = vperm.slane %v43, %v46
    %v48 = vadd.s32 %v46, 4294967288
    %v49 = vperm.slane %v44, %v48
    %vm50 = vcmask 130112
    %v51 = vsel %vm50, %v49, %v47
    %vm52 = vcmask 73728
    %53 = vst.msk [vmem:[#allocation5] sm:$0x1] %vm52, %v51
    // Predicated region
    $region10: #{tpu_custom_call.1} parent=1 // pred_check
      _
    $region11: #{tpu_custom_call.1} parent=1 // pred_check_branch
      %55 = sbr.rel (0) target = $region13
    $region12: #{tpu_custom_call.1} parent=1 // pred_region
      %57 = vsyncadd [#allocation4], 0
      %s59 = sshll.u32 [#allocation5], 4
      %s60 = int_to_ptr.vmem [resolvable:$true] %s59
      %s61 = sshll.u32 %s1, 4
      %s62 = int_to_ptr.hbm [resolvable:$true] %s61
      %64 = dma.vmem_to_hbm [thread:$0]  %s60, 16, %s62, [#allocation4]
    $region13: #{tpu_custom_call.1} parent=1 // pred_fallthru
      _
    // Predicated region
    $region14: #{tpu_custom_call.1} parent=1 // pred_check
      _
    $region15: #{tpu_custom_call.1} parent=1 // pred_check_branch
      %66 = sbr.rel (0) target = $region17
    $region16: #{tpu_custom_call.1} parent=1 // pred_region
      %68 = dma.done [#allocation4], 16
    $region17: #{tpu_custom_call.1} parent=1 // pred_fallthru
      _
    %69 = vsyncpa [#allocation3], 1
    %70 = vsyncpa [#allocation4], 1

</llo_original>
